<compile_context>
chip_gen: v7x
topology: tpu7x:2x2x1
jax: 0.10.0
libtpu: 0.0.40
codegen_flags: <defaults>
</compile_context>

<pallas_src>
import math
from collections import OrderedDict

import jax
import jax.numpy as jnp
from jax.experimental import pallas as pl
from jax.experimental.pallas import tpu as pltpu


LANE = 128
SUBLANE = 8
COMPUTE_DTYPE = jnp.bfloat16  # MXU-native on v5e/v6e/v7x; accumulation stays f32.

# Only single-buffer the (grid-invariant) weight blocks once their
# double-buffered footprint starts to matter; at small sizes the default
# double-buffered path is used.
_SINGLE_BUFFER_WEIGHT_BYTES = 8 * 1024 * 1024
_DEFAULT_VMEM_LIMIT = 32 * 1024 * 1024
_MAX_VMEM_LIMIT = 64 * 1024 * 1024  # fits every TPU generation (v7x = 64 MiB/TC)


def _round_up(x, m):
    return ((x + m - 1) // m) * m


def _choose_block_m(batch):
    bp8 = _round_up(max(int(batch), 1), SUBLANE)
    if bp8 <= 128:
        return bp8          # single tile; don't pad a tiny batch up to 128 rows
    if bp8 <= 1024:
        return 128          # >=2 grid steps -> megacore-parallel batch tiles
    return 256


# ---------------------------------------------------------------------------
# Pallas kernel: fused n-layer MLP (Linear -> ReLU -> ... -> Linear)
# bf16 matmuls on the MXU, f32 accumulation / bias / ReLU.
# ---------------------------------------------------------------------------
def _make_mlp_kernel(n_layers):
    def kernel(*refs):
        # refs = (z_ref, w1, b1, ..., wn, bn, out_ref); all weight/bias refs
        # are the per-feature 2-D views (leading feature dim squeezed).
        z_ref = refs[0]
        out_ref = refs[-1]
        h = z_ref[...]                                   # bf16 activations
        for i in range(n_layers):
            w = refs[1 + 2 * i][...]                     # bf16 (in_p, out_p)
            b = refs[2 + 2 * i][...]                     # f32  (1,   out_p)
            acc = jnp.dot(h, w, preferred_element_type=jnp.float32) + b
            if i < n_layers - 1:
                h = jnp.maximum(acc, 0.0).astype(COMPUTE_DTYPE)   # ReLU
            else:
                out_ref[...] = acc.astype(out_ref.dtype)
    return kernel


# ---------------------------------------------------------------------------
# One-time parameter packing (padding + bf16 cast happen here, NOT per call)
# ---------------------------------------------------------------------------
def _pack_params(weights, biases):
    """Pad every dim to a multiple of 128 lanes; weights -> bf16, biases -> f32."""
    ws, bs = [], []
    for w, b in zip(weights, biases):
        di, do = w.shape
        dip, dop = _round_up(di, LANE), _round_up(do, LANE)
        wp = jnp.zeros((dip, dop), COMPUTE_DTYPE).at[:di, :do].set(
            w.astype(COMPUTE_DTYPE))
        bp = jnp.zeros((1, dop), jnp.float32).at[:, :do].set(
            b.astype(jnp.float32))
        ws.append(wp)
        bs.append(bp)
    return ws, bs


def _pack_params_stacked(per_feature_params):
    """Stack all per-feature MLPs on a leading feature axis (padded, bf16)."""
    n_layers = len(per_feature_params[0][0])
    ws, bs = [], []
    for l in range(n_layers):
        di = max(w[l].shape[0] for w, _ in per_feature_params)
        do = max(w[l].shape[1] for w, _ in per_feature_params)
        dip, dop = _round_up(di, LANE), _round_up(do, LANE)
        wl, bl = [], []
        for w, b in per_feature_params:
            wi = jnp.zeros((dip, dop), COMPUTE_DTYPE).at[
                :w[l].shape[0], :w[l].shape[1]].set(w[l].astype(COMPUTE_DTYPE))
            bi = jnp.zeros((1, dop), jnp.float32).at[
                :, :b[l].shape[1]].set(b[l].astype(jnp.float32))
            wl.append(wi)
            bl.append(bi)
        ws.append(jnp.stack(wl))       # (F, in_p, out_p) bf16
        bs.append(jnp.stack(bl))       # (F, 1,    out_p) f32
    return ws, bs


def _weight_footprint_bytes(ws, bs):
    wbytes = sum(w.shape[-2] * w.shape[-1] * w.dtype.itemsize for w in ws)
    wbytes += sum(b.shape[-2] * b.shape[-1] * b.dtype.itemsize for b in bs)
    return wbytes


def _weight_pipeline_mode(ws, bs):
    """Single-buffer the block-invariant weights when they get large (v7x VMEM)."""
    wbytes = _weight_footprint_bytes(ws, bs)
    if 2 * wbytes > _SINGLE_BUFFER_WEIGHT_BYTES:
        # Constant index_map across the batch grid => one buffer suffices;
        # halves resident weight VMEM (matters on v7x's 64 MiB / TC).
        return pl.Buffered(1), 1
    return None, 2


def _estimate_vmem_bytes(block_m, dz_p, out_p, ws, bs, weight_buffers):
    wbytes = _weight_footprint_bytes(ws, bs)
    max_hidden = max(w.shape[-1] for w in ws)
    io_bytes = 2 * block_m * dz_p * 2 + 2 * block_m * out_p * 4
    act_bytes = 2 * block_m * max_hidden * 4          # f32 acc + bf16 h headroom
    return weight_buffers * wbytes + io_bytes + act_bytes


def _vmem_limit(est_bytes):
    if est_bytes <= _DEFAULT_VMEM_LIMIT:
        return None
    # TODO(synk): K-tile the hidden dimension (reduction grid axis or
    # pltpu.emit_pipeline over weight column blocks) instead of just raising
    # the limit once the weights no longer fit v7x's 64 MiB VMEM.
    return min(int(est_bytes * 1.25), _MAX_VMEM_LIMIT)


# ---------------------------------------------------------------------------
# Pallas-call wrappers
# ---------------------------------------------------------------------------
@jax.jit
def _joint_mlp(z, ws, bs):
    """z: (B, dz) f32; ws[l]: (in_p, out_p) bf16; bs[l]: (1, out_p) f32.
    Returns (B, out_p) f32 padded logits (caller slices off real out dim)."""
    B, dz = z.shape
    dz_p = ws[0].shape[0]
    out_p = ws[-1].shape[1]
    block_m = _choose_block_m(B)
    Bp = _round_up(B, block_m)
    z_p = jnp.pad(z.astype(COMPUTE_DTYPE), ((0, Bp - B), (0, dz_p - dz)))

    n_layers = len(ws)
    pipeline_mode, nbuf = _weight_pipeline_mode(ws, bs)
    pm_kwargs = {} if pipeline_mode is None else dict(pipeline_mode=pipeline_mode)

    in_specs = [pl.BlockSpec((block_m, dz_p), lambda i: (i, 0))]
    for w, b in zip(ws, bs):
        in_specs.append(pl.BlockSpec(w.shape, lambda i: (0, 0), **pm_kwargs))
        in_specs.append(pl.BlockSpec(b.shape, lambda i: (0, 0), **pm_kwargs))

    est = _estimate_vmem_bytes(block_m, dz_p, out_p, ws, bs, nbuf)

    out = pl.pallas_call(
        _make_mlp_kernel(n_layers),
        out_shape=jax.ShapeDtypeStruct((Bp, out_p), jnp.float32),
        grid_spec=pltpu.PrefetchScalarGridSpec(
            num_scalar_prefetch=0,
            grid=(Bp // block_m,),
            in_specs=in_specs,
            out_specs=pl.BlockSpec((block_m, out_p), lambda i: (i, 0)),
        ),
        compiler_params=pltpu.CompilerParams(
            dimension_semantics=("parallel",),
            vmem_limit_bytes=_vmem_limit(est)),
    )(z_p, *[x for pair in zip(ws, bs) for x in pair])
    return out[:B]


@jax.jit
def _stacked_mlp(z, ws, bs):
    """All per-feature MLPs in one launch.
    z: (B, dz); ws[l]: (F, in_p, out_p) bf16; bs[l]: (F, 1, out_p) f32.
    Returns (F, B, out_p) f32 padded logits."""
    B, dz = z.shape
    F = ws[0].shape[0]
    dz_p = ws[0].shape[1]
    out_p = ws[-1].shape[2]
    block_m = _choose_block_m(B)
    Bp = _round_up(B, block_m)
    z_p = jnp.pad(z.astype(COMPUTE_DTYPE), ((0, Bp - B), (0, dz_p - dz)))

    n_layers = len(ws)
    pipeline_mode, nbuf = _weight_pipeline_mode(ws, bs)
    pm_kwargs = {} if pipeline_mode is None else dict(pipeline_mode=pipeline_mode)

    in_specs = [pl.BlockSpec((block_m, dz_p), lambda f, i: (i, 0))]
    for w, b in zip(ws, bs):
        in_specs.append(pl.BlockSpec((pl.Squeezed(),) + w.shape[1:],
                                     lambda f, i: (f, 0, 0), **pm_kwargs))
        in_specs.append(pl.BlockSpec((pl.Squeezed(),) + b.shape[1:],
                                     lambda f, i: (f, 0, 0), **pm_kwargs))

    est = _estimate_vmem_bytes(block_m, dz_p, out_p, ws, bs, nbuf)

    out = pl.pallas_call(
        _make_mlp_kernel(n_layers),
        out_shape=jax.ShapeDtypeStruct((F, Bp, out_p), jnp.float32),
        grid_spec=pltpu.PrefetchScalarGridSpec(
            num_scalar_prefetch=0,
            # batch innermost: each feature's weights stay resident while we
            # sweep its batch tiles.
            grid=(F, Bp // block_m),
            in_specs=in_specs,
            out_specs=pl.BlockSpec((pl.Squeezed(), block_m, out_p),
                                   lambda f, i: (f, i, 0)),
        ),
        compiler_params=pltpu.CompilerParams(
            dimension_semantics=("parallel", "parallel"),
            vmem_limit_bytes=_vmem_limit(est)),
    )(z_p, *[x for pair in zip(ws, bs) for x in pair])
    return out[:, :B]


# ---------------------------------------------------------------------------
# Parameter construction (deterministic, PyTorch-Linear-style uniform init)
# ---------------------------------------------------------------------------
def init_mlp_params(key, input_dim, output_dim, hidden_dim, n_layers):
    """Mirrors MLP.__init__ layer sizing; weights stored as (in, out)."""
    weights, biases = [], []
    dim_i = input_dim
    dim_ip1 = hidden_dim if n_layers > 1 else output_dim
    for i in range(n_layers):
        key, wk, bk = jax.random.split(key, 3)
        bound = 1.0 / math.sqrt(dim_i)
        w = jax.random.uniform(wk, (dim_i, dim_ip1), jnp.float32, -bound, bound)
        b = jax.random.uniform(bk, (1, dim_ip1), jnp.float32, -bound, bound)
        weights.append(w)
        biases.append(b)
        dim_i = dim_ip1
        dim_ip1 = output_dim if i == n_layers - 2 else hidden_dim
    return weights, biases


class FeaturePredictorPallas:
    """JAX/Pallas re-implementation of FeaturePredictor.forward."""

    def __init__(self, dim_z, dim_h, num_layers, joint, key, **features):
        self.dim_z = dim_z
        self.dim_h = dim_h
        self.num_layers = num_layers
        self.joint = joint
        self.features = OrderedDict(features)
        self.dim_output = sum(max(1, v) for v in self.features.values())
        if joint:
            self.weights, self.biases = init_mlp_params(
                key, dim_z, self.dim_output, dim_h, num_layers)
            # One-time pad + bf16 pack (keeps padding off the hot path).
            self._ws, self._bs = _pack_params(self.weights, self.biases)
        else:
            self.params = OrderedDict()
            for k, v in self.features.items():
                key, sub = jax.random.split(key)
                self.params[k] = init_mlp_params(
                    sub, dim_z, max(1, v), dim_h, num_layers)
            # All per-feature MLPs fused into one stacked parameter set.
            self._ws, self._bs = _pack_params_stacked(list(self.params.values()))

    # -- Pallas-backed MLP evaluations ------------------------------------
    def _joint_logits(self, z):
        lead = z.shape[:-1]
        z2 = z.reshape(-1, z.shape[-1])
        y = _joint_mlp(z2, self._ws, self._bs)[:, :self.dim_output]
        return y.reshape(*lead, self.dim_output)

    def _feature_logits(self, z):
        lead = z.shape[:-1]
        z2 = z.reshape(-1, z.shape[-1])
        y = _stacked_mlp(z2, self._ws, self._bs)   # (F, B, out_p)
        out = OrderedDict()
        for idx, (k, v) in enumerate(self.features.items()):
            d = max(1, v)
            out[k] = y[idx, :, :d].reshape(*lead, d)
        return out

    # -- forward (mirrors torch FeaturePredictor.forward) ------------------
    def forward(self, z, mode="dict", logits=False, squeeze=True):
        if self.joint:
            _logits = self._joint_logits(z)
            # MLP(squeeze=True): torch .squeeze(-1) only squeezes a size-1 dim
            if _logits.shape[-1] == 1:
                _logits = _logits[..., 0]
            if mode == "tensor" and logits:
                return _logits
            outputs = OrderedDict()
            off = 0
            for k, v in self.features.items():
                s = max(v, 1)
                o = _logits[..., off:off + s]
                off += s
                if squeeze and o.shape[-1] == 1:
                    o = o[..., 0]
                if v == 1 and not logits:
                    o = jax.nn.sigmoid(o)
                elif v > 1 and not logits:
                    o = jax.nn.softmax(o, axis=-1)
                outputs[k] = o
        else:
            raw = self._feature_logits(z)   # one fused pallas_call for all features
            outputs = OrderedDict()
            for k, v in self.features.items():
                o = raw[k]
                if squeeze and o.shape[-1] == 1:
                    o = o[..., 0]
                if v == 1 and not logits:
                    o = jax.nn.sigmoid(o)
                elif v > 1 and not logits:
                    o = jax.nn.softmax(o, axis=-1)
                outputs[k] = o

        if mode == "dict":
            return outputs
        elif mode == "tuple":
            return tuple(outputs.values())
        elif mode == "tensor":
            return jnp.concatenate(list(outputs.values()), axis=-1)
        else:
            raise Exception(f"Invalid mode: {mode}")


# ---------------------------------------------------------------------------
# Pure-JAX reference (same bf16-matmul / f32-accumulate numerics as the kernel)
# ---------------------------------------------------------------------------
def _ref_mlp_bf16(z, weights, biases):
    h = z.astype(jnp.bfloat16)
    for i, (w, b) in enumerate(zip(weights, biases)):
        acc = jnp.dot(h, w.astype(jnp.bfloat16),
                      preferred_element_type=jnp.float32) + b.astype(jnp.float32)
        if i < len(weights) - 1:
            h = jnp.maximum(acc, 0.0).astype(jnp.bfloat16)
        else:
            h = acc
    return h


if __name__ == "__main__":
    key = jax.random.PRNGKey(0)

    dim_z, dim_h, num_layers = 32, 64, 3
    batch = 8
    # feature spec: 0 = continuous, 1 = binary, >=2 = multi-class
    features = OrderedDict(size=0, is_round=1, color=4, shape=3)  # dim_output = 9

    pkey, zkey, zkey2 = jax.random.split(key, 3)
    model = FeaturePredictorPallas(dim_z, dim_h, num_layers, joint=True,
                                   key=pkey, **features)
    z = jax.random.normal(zkey, (batch, dim_z), jnp.float32)

    # --- joint path, small batch (single-tile grid) -----------------------
    logits_kernel = model.forward(z, mode="tensor", logits=True)
    logits_ref = _ref_mlp_bf16(z, model.weights, model.biases)
    jax.block_until_ready(logits_kernel)
    assert jnp.allclose(logits_kernel, logits_ref, atol=1e-2, rtol=1e-2), \
        "Pallas joint MLP mismatch vs reference (small batch)"

    # --- joint path, larger batch (block_m=128, >=2 parallel grid steps) --
    z_big = jax.random.normal(zkey2, (256, dim_z), jnp.float32)
    logits_big = model.forward(z_big, mode="tensor", logits=True)
    ref_big = _ref_mlp_bf16(z_big, model.weights, model.biases)
    jax.block_until_ready(logits_big)
    assert jnp.allclose(logits_big, ref_big, atol=1e-2, rtol=1e-2), \
        "Pallas joint MLP mismatch vs reference (large batch)"

    # --- full forward with per-feature activations ------------------------
    out = model.forward(z, mode="dict", logits=False, squeeze=True)
    jax.block_until_ready(out)
    assert out["size"].shape == (batch,)
    assert out["is_round"].shape == (batch,)
    assert out["color"].shape == (batch, 4)
    assert out["shape"].shape == (batch, 3)

    # --- non-joint path: all per-feature MLPs fused into one pallas_call --
    model_nj = FeaturePredictorPallas(dim_z, dim_h, num_layers, joint=False,
                                      key=pkey, **features)
    nj_logits = model_nj.forward(z, mode="tuple", logits=True, squeeze=False)
    jax.block_until_ready(nj_logits)
    for (k, v), o in zip(features.items(), nj_logits):
        w_f, b_f = model_nj.params[k]
        ref_f = _ref_mlp_bf16(z, w_f, b_f)
        assert o.shape == (batch, max(1, v))
        assert jnp.allclose(o, ref_f, atol=1e-2, rtol=1e-2), \
            f"Pallas non-joint MLP mismatch vs reference for feature {k}"

    # non-joint, larger batch (exercises the 2-D grid with >1 batch tile)
    nj_big = model_nj.forward(z_big, mode="tuple", logits=True, squeeze=False)
    jax.block_until_ready(nj_big)
    for (k, v), o in zip(features.items(), nj_big):
        w_f, b_f = model_nj.params[k]
        ref_f = _ref_mlp_bf16(z_big, w_f, b_f)
        assert jnp.allclose(o, ref_f, atol=1e-2, rtol=1e-2), \
            f"Pallas non-joint MLP mismatch vs reference for feature {k} (large batch)"

    out_nj = model_nj.forward(z, mode="tuple", logits=False, squeeze=True)
    jax.block_until_ready(out_nj)

    print("KERNEL_OK")
</pallas_src>

<mosaic_0001>
module attributes {stable_mosaic.version = 11 : i64} {
  func.func @kernel(%arg0: i32, %arg1: memref<8x128xbf16, #tpu.memory_space<vmem>>, %arg2: memref<128x128xbf16, #tpu.memory_space<vmem>>, %arg3: memref<1x128xf32, #tpu.memory_space<vmem>>, %arg4: memref<128x128xbf16, #tpu.memory_space<vmem>>, %arg5: memref<1x128xf32, #tpu.memory_space<vmem>>, %arg6: memref<128x128xbf16, #tpu.memory_space<vmem>>, %arg7: memref<1x128xf32, #tpu.memory_space<vmem>>, %arg8: memref<8x128xf32, #tpu.memory_space<vmem>>) attributes {dimension_semantics = [#tpu.dimension_semantics<parallel>], iteration_bounds = array<i64: 1>, scalar_prefetch = 0 : i64, scratch_operands = 0 : i64, tpu.core_type = #tpu.core_type<tc>, window_params = [{transform_indices = @transform_0, window_bounds = array<i64: 8, 128>}, {pipeline_mode = #tpu.pipeline_mode<synchronous>, transform_indices = @transform_1, window_bounds = array<i64: 128, 128>}, {pipeline_mode = #tpu.pipeline_mode<synchronous>, transform_indices = @transform_2, window_bounds = array<i64: 1, 128>}, {pipeline_mode = #tpu.pipeline_mode<synchronous>, transform_indices = @transform_3, window_bounds = array<i64: 128, 128>}, {pipeline_mode = #tpu.pipeline_mode<synchronous>, transform_indices = @transform_4, window_bounds = array<i64: 1, 128>}, {pipeline_mode = #tpu.pipeline_mode<synchronous>, transform_indices = @transform_5, window_bounds = array<i64: 128, 128>}, {pipeline_mode = #tpu.pipeline_mode<synchronous>, transform_indices = @transform_6, window_bounds = array<i64: 1, 128>}, {transform_indices = @transform_7, window_bounds = array<i64: 8, 128>}]} {
    %c0 = arith.constant 0 : index
    %c0_0 = arith.constant 0 : index
    %0 = vector.load %arg1[%c0, %c0_0] : memref<8x128xbf16, #tpu.memory_space<vmem>>, vector<8x128xbf16>
    %c0_1 = arith.constant 0 : index
    %c0_2 = arith.constant 0 : index
    %1 = vector.load %arg2[%c0_1, %c0_2] : memref<128x128xbf16, #tpu.memory_space<vmem>>, vector<128x128xbf16>
    %c0_3 = arith.constant 0 : index
    %c0_4 = arith.constant 0 : index
    %2 = vector.load %arg3[%c0_3, %c0_4] : memref<1x128xf32, #tpu.memory_space<vmem>>, vector<1x128xf32>
    %cst = arith.constant dense<0.000000e+00> : vector<8x128xf32>
    %3 = tpu.matmul %0, %1, %cst {dimension_numbers = #tpu.dot_dimension_numbers<[1], [0], [0], [1], [0, 0, 1, 1], [], []>} : vector<8x128xbf16>, vector<128x128xbf16>, vector<8x128xf32> -> vector<8x128xf32>
    %4 = vector.broadcast %2 : vector<1x128xf32> to vector<8x128xf32>
    %5 = arith.addf %3, %4 : vector<8x128xf32>
    %cst_5 = arith.constant 0.000000e+00 : f32
    %6 = vector.broadcast %cst_5 : f32 to vector<8x128xf32>
    %7 = arith.maximumf %5, %6 : vector<8x128xf32>
    %8 = arith.truncf %7 : vector<8x128xf32> to vector<8x128xbf16>
    %c0_6 = arith.constant 0 : index
    %c0_7 = arith.constant 0 : index
    %9 = vector.load %arg4[%c0_6, %c0_7] : memref<128x128xbf16, #tpu.memory_space<vmem>>, vector<128x128xbf16>
    %c0_8 = arith.constant 0 : index
    %c0_9 = arith.constant 0 : index
    %10 = vector.load %arg5[%c0_8, %c0_9] : memref<1x128xf32, #tpu.memory_space<vmem>>, vector<1x128xf32>
    %cst_10 = arith.constant dense<0.000000e+00> : vector<8x128xf32>
    %11 = tpu.matmul %8, %9, %cst_10 {dimension_numbers = #tpu.dot_dimension_numbers<[1], [0], [0], [1], [0, 0, 1, 1], [], []>} : vector<8x128xbf16>, vector<128x128xbf16>, vector<8x128xf32> -> vector<8x128xf32>
    %12 = vector.broadcast %10 : vector<1x128xf32> to vector<8x128xf32>
    %13 = arith.addf %11, %12 : vector<8x128xf32>
    %cst_11 = arith.constant 0.000000e+00 : f32
    %14 = vector.broadcast %cst_11 : f32 to vector<8x128xf32>
    %15 = arith.maximumf %13, %14 : vector<8x128xf32>
    %16 = arith.truncf %15 : vector<8x128xf32> to vector<8x128xbf16>
    %c0_12 = arith.constant 0 : index
    %c0_13 = arith.constant 0 : index
    %17 = vector.load %arg6[%c0_12, %c0_13] : memref<128x128xbf16, #tpu.memory_space<vmem>>, vector<128x128xbf16>
    %c0_14 = arith.constant 0 : index
    %c0_15 = arith.constant 0 : index
    %18 = vector.load %arg7[%c0_14, %c0_15] : memref<1x128xf32, #tpu.memory_space<vmem>>, vector<1x128xf32>
    %cst_16 = arith.constant dense<0.000000e+00> : vector<8x128xf32>
    %19 = tpu.matmul %16, %17, %cst_16 {dimension_numbers = #tpu.dot_dimension_numbers<[1], [0], [0], [1], [0, 0, 1, 1], [], []>} : vector<8x128xbf16>, vector<128x128xbf16>, vector<8x128xf32> -> vector<8x128xf32>
    %20 = vector.broadcast %18 : vector<1x128xf32> to vector<8x128xf32>
    %21 = arith.addf %19, %20 : vector<8x128xf32>
    %c0_17 = arith.constant 0 : index
    %c0_18 = arith.constant 0 : index
    %22 = vector.load %arg8[%c0_17, %c0_18] : memref<8x128xf32, #tpu.memory_space<vmem>>, vector<8x128xf32>
    tpu.vector_store %arg8[%c0_17, %c0_18], %21 {strides = array<i32>} : memref<8x128xf32, #tpu.memory_space<vmem>>, vector<8x128xf32>,
    return
  }
  func.func @transform_0(%arg0: i32) -> (i32, i32) {
    %c0_i32 = arith.constant 0 : i32
    %c0_i32_0 = arith.constant 0 : i32
    return %arg0, %c0_i32 : i32, i32
  }
  func.func @transform_1(%arg0: i32) -> (i32, i32) {
    %c0_i32 = arith.constant 0 : i32
    %c0_i32_0 = arith.constant 0 : i32
    %c0_i32_1 = arith.constant 0 : i32
    return %c0_i32, %c0_i32_0 : i32, i32
  }
  func.func @transform_2(%arg0: i32) -> (i32, i32) {
    %c0_i32 = arith.constant 0 : i32
    %c0_i32_0 = arith.constant 0 : i32
    %c0_i32_1 = arith.constant 0 : i32
    return %c0_i32, %c0_i32_0 : i32, i32
  }
  func.func @transform_3(%arg0: i32) -> (i32, i32) {
    %c0_i32 = arith.constant 0 : i32
    %c0_i32_0 = arith.constant 0 : i32
    %c0_i32_1 = arith.constant 0 : i32
    return %c0_i32, %c0_i32_0 : i32, i32
  }
  func.func @transform_4(%arg0: i32) -> (i32, i32) {
    %c0_i32 = arith.constant 0 : i32
    %c0_i32_0 = arith.constant 0 : i32
    %c0_i32_1 = arith.constant 0 : i32
    return %c0_i32, %c0_i32_0 : i32, i32
  }
  func.func @transform_5(%arg0: i32) -> (i32, i32) {
    %c0_i32 = arith.constant 0 : i32
    %c0_i32_0 = arith.constant 0 : i32
    %c0_i32_1 = arith.constant 0 : i32
    return %c0_i32, %c0_i32_0 : i32, i32
  }
  func.func @transform_6(%arg0: i32) -> (i32, i32) {
    %c0_i32 = arith.constant 0 : i32
    %c0_i32_0 = arith.constant 0 : i32
    %c0_i32_1 = arith.constant 0 : i32
    return %c0_i32, %c0_i32_0 : i32, i32
  }
  func.func @transform_7(%arg0: i32) -> (i32, i32) {
    %c0_i32 = arith.constant 0 : i32
    %c0_i32_0 = arith.constant 0 : i32
    return %arg0, %c0_i32 : i32, i32
  }
}

</mosaic_0001>

<llo_original>
// kernel: _joint_mlp.1
$region0: #{_joint_mlp.1}
  #allocation0 [shape = 'u32[]', space=smem, size = 0x4, offset = 0x4, fixed_abs, tag = 'smem constant byte address 0x4 - core index']
  #allocation1 [shape = 'u32[144,128]{1,0:T(1,128)}', space=vmem, size = 0x12000, scoped, tag = 'internal scratch']
  %s0 = inlined_call_operand.vmem [shape: bf16[8,128], index: 0, kind: input, shape index: {}]
  %s1 = inlined_call_operand.hbm [shape: bf16[128,128], index: 1, kind: input, shape index: {}]
  %s2 = inlined_call_operand.vmem [shape: f32[1,128], index: 2, kind: input, shape index: {}]
  %s3 = inlined_call_operand.hbm [shape: bf16[128,128], index: 3, kind: input, shape index: {}]
  %s4 = inlined_call_operand.vmem [shape: f32[1,128], index: 4, kind: input, shape index: {}]
  %s5 = inlined_call_operand.hbm [shape: bf16[128,128], index: 5, kind: input, shape index: {}]
  %s6 = inlined_call_operand.vmem [shape: f32[1,128], index: 6, kind: input, shape index: {}]
  %s7 = inlined_call_operand.hbm [shape: f32[8,128], index: 7, kind: output, shape index: {}]
  %s8 = sld [smem:[#allocation0]]
  $region50: #{_joint_mlp.1} parent=0
    _
  %s10 = ssub.s32 1, %s8
  %s11 = scalar_select 0, %s10, %s8
  $region1: #{_joint_mlp.1} parent=0
    #allocation2 [shape = 'u8[32768]{0}', space=vmem, size = 0x8000, scoped, tag = 'input window, operand 1, single buffered']
    #allocation3 [shape = 's32[1]{0}', space=sflag, size = 0x4, scoped, tag = 'scoped memory for _joint_mlp.1']
    #allocation4 [shape = 's32[1]{0}', space=sflag, size = 0x4, scoped, tag = 'scoped memory for _joint_mlp.1']
    #allocation5 [shape = 'u8[32768]{0}', space=vmem, size = 0x8000, scoped, tag = 'input window, operand 3, single buffered']
    #allocation6 [shape = 's32[1]{0}', space=sflag, size = 0x4, scoped, tag = 'scoped memory for _joint_mlp.1']
    #allocation7 [shape = 'u8[32768]{0}', space=vmem, size = 0x8000, scoped, tag = 'input window, operand 5, single buffered']
    #allocation8 [shape = 'u8[4096]{0}', space=vmem, size = 0x1000, scoped, tag = 'output window, operand 0, single buffered']
    %12 = vsyncpa [#allocation3], 0
    %13 = vsyncpa [#allocation6], 0
    %14 = vsyncpa [#allocation4], 0
    // Predicated region
    $region2: #{_joint_mlp.1} parent=1 // pred_check
      _
    $region3: #{_joint_mlp.1} parent=1 // pred_check_branch
      %16 = sbr.rel (0) target = $region5
    $region4: #{_joint_mlp.1} parent=1 // pred_region
      _
    $region5: #{_joint_mlp.1} parent=1 // pred_fallthru
      _
    // Predicated region
    $region6: #{_joint_mlp.1} parent=1 // pred_check
      _
    $region7: #{_joint_mlp.1} parent=1 // pred_check_branch
      %18 = sbr.rel (0) target = $region9
    $region8: #{_joint_mlp.1} parent=1 // pred_region
      %s20 = ssub.s32 1024, 1024
      %21 = vsyncadd [#allocation3], %s20
      %s22 = sshll.u32 [#allocation2], 4
      %s23 = int_to_ptr.vmem [resolvable:$true] %s22
      %28 = dma.hbm_to_vmem [thread:$0]  %s1, 1024, %s23, [#allocation3], 64, 64, 4
    $region9: #{_joint_mlp.1} parent=1 // pred_fallthru
      _
    // Predicated region
    $region10: #{_joint_mlp.1} parent=1 // pred_check
      _
    $region11: #{_joint_mlp.1} parent=1 // pred_check_branch
      %30 = sbr.rel (0) target = $region13
    $region12: #{_joint_mlp.1} parent=1 // pred_region
      _
    $region13: #{_joint_mlp.1} parent=1 // pred_fallthru
      _
    // Predicated region
    $region14: #{_joint_mlp.1} parent=1 // pred_check
      _
    $region15: #{_joint_mlp.1} parent=1 // pred_check_branch
      %32 = sbr.rel (0) target = $region17
    $region16: #{_joint_mlp.1} parent=1 // pred_region
      %s34 = ssub.s32 1024, 1024
      %35 = vsyncadd [#allocation6], %s34
      %s36 = sshll.u32 [#allocation5], 4
      %s37 = int_to_ptr.vmem [resolvable:$true] %s36
      %42 = dma.hbm_to_vmem [thread:$0]  %s3, 1024, %s37, [#allocation6], 64, 64, 4
    $region17: #{_joint_mlp.1} parent=1 // pred_fallthru
      _
    // Predicated region
    $region18: #{_joint_mlp.1} parent=1 // pred_check
      _
    $region19: #{_joint_mlp.1} parent=1 // pred_check_branch
      %44 = sbr.rel (0) target = $region21
    $region20: #{_joint_mlp.1} parent=1 // pred_region
      _
    $region21: #{_joint_mlp.1} parent=1 // pred_fallthru
      _
    // Predicated region
    $region22: #{_joint_mlp.1} parent=1 // pred_check
      _
    $region23: #{_joint_mlp.1} parent=1 // pred_check_branch
      %46 = sbr.rel (0) target = $region25
    $region24: #{_joint_mlp.1} parent=1 // pred_region
      %s48 = ssub.s32 1024, 1024
      %49 = vsyncadd [#allocation6], %s48
      %s50 = sshll.u32 [#allocation7], 4
      %s51 = int_to_ptr.vmem [resolvable:$true] %s50
      %56 = dma.hbm_to_vmem [thread:$0]  %s5, 1024, %s51, [#allocation6], 64, 64, 4
    $region25: #{_joint_mlp.1} parent=1 // pred_fallthru
      _
    // Predicated region
    $region26: #{_joint_mlp.1} parent=1 // pred_check
      _
    $region27: #{_joint_mlp.1} parent=1 // pred_check_branch
      %58 = sbr.rel (0) target = $region29
    $region28: #{_joint_mlp.1} parent=1 // pred_region
      _
    $region29: #{_joint_mlp.1} parent=1 // pred_fallthru
      _
    // Predicated region
    $region30: #{_joint_mlp.1} parent=1 // pred_check
      _
    $region31: #{_joint_mlp.1} parent=1 // pred_check_branch
      %60 = sbr.rel (0) target = $region33
    $region32: #{_joint_mlp.1} parent=1 // pred_region
      %61 = dma.done [#allocation3], 1024
    $region33: #{_joint_mlp.1} parent=1 // pred_fallthru
      _
    // Predicated region
    $region34: #{_joint_mlp.1} parent=1 // pred_check
      _
    $region35: #{_joint_mlp.1} parent=1 // pred_check_branch
      %63 = sbr.rel (0) target = $region37
    $region36: #{_joint_mlp.1} parent=1 // pred_region
      %64 = dma.done [#allocation6], 1024
    $region37: #{_joint_mlp.1} parent=1 // pred_fallthru
      _
    // Predicated region
    $region38: #{_joint_mlp.1} parent=1 // pred_check
      _
    $region39: #{_joint_mlp.1} parent=1 // pred_check_branch
      %66 = sbr.rel (0) target = $region41
    $region40: #{_joint_mlp.1} parent=1 // pred_region
      %67 = dma.done [#allocation6], 1024
    $region41: #{_joint_mlp.1} parent=1 // pred_fallthru
      _
    %v69 = vld [vmem:[%s0] sm:$0xf]
    %v70 = vld [vmem:[#allocation2] sm:$0xf]
    %v71 = vld [vmem:[#allocation2 + $0x4] sm:$0xf]
    %v72 = vld [vmem:[#allocation2 + $0x8] sm:$0xf]
    %v73 = vld [vmem:[#allocation2 + $0xc] sm:$0xf]
    %v74 = vld [vmem:[#allocation2 + $0x10] sm:$0xf]
    %v75 = vld [vmem:[#allocation2 + $0x14] sm:$0xf]
    %v76 = vld [vmem:[#allocation2 + $0x18] sm:$0xf]
    %v77 = vld [vmem:[#allocation2 + $0x1c] sm:$0xf]
    %v78 = vld [vmem:[#allocation2 + $0x20] sm:$0xf]
    %v79 = vld [vmem:[#allocation2 + $0x24] sm:$0xf]
    %v80 = vld [vmem:[#allocation2 + $0x28] sm:$0xf]
    %v81 = vld [vmem:[#allocation2 + $0x2c] sm:$0xf]
    %v82 = vld [vmem:[#allocation2 + $0x30] sm:$0xf]
    %v83 = vld [vmem:[#allocation2 + $0x34] sm:$0xf]
    %v84 = vld [vmem:[#allocation2 + $0x38] sm:$0xf]
    %v85 = vld [vmem:[#allocation2 + $0x3c] sm:$0xf]
    %v86 = vld [vmem:[%s2] sm:$0x1]
    %v88 = vlaneseq
    %v89 = vshrl.u32 %v88, 7
    %v90 = vsub.s32 0, %v89
    %v91 = vrot.slane %v86, %v90
    %v109 = vunpack.c.l.b16 %v70
    %v110 = vunpack.c.l.b16 %v71
    %v111 = vunpack.c.l.b16 %v72
    %v112 = vunpack.c.l.b16 %v73
    %v113 = vunpack.c.l.b16 %v74
    %v114 = vunpack.c.l.b16 %v75
    %v115 = vunpack.c.l.b16 %v76
    %v116 = vunpack.c.l.b16 %v77
    %v117 = vunpack.c.l.b16 %v78
    %v118 = vunpack.c.l.b16 %v79
    %v119 = vunpack.c.l.b16 %v80
    %v120 = vunpack.c.l.b16 %v81
    %v121 = vunpack.c.l.b16 %v82
    %v122 = vunpack.c.l.b16 %v83
    %v123 = vunpack.c.l.b16 %v84
    %v124 = vunpack.c.l.b16 %v85
    %v125 = vpack.c.b16 %v110, %v109
    %v126 = vpack.c.b16 %v112, %v111
    %v127 = vpack.c.b16 %v114, %v113
    %v128 = vpack.c.b16 %v116, %v115
    %v129 = vpack.c.b16 %v118, %v117
    %v130 = vpack.c.b16 %v120, %v119
    %v131 = vpack.c.b16 %v122, %v121
    %v132 = vpack.c.b16 %v124, %v123
    %141 = vmatprep.subr.bf16.mxu0 0
    %142 = vmatpush1.bf16.msra.mxu0 %v125
    %143 = vmatprep.subr.bf16.mxu0 0
    %144 = vmatpush1.bf16.msra.mxu0 %v126
    %145 = vmatprep.subr.bf16.mxu0 0
    %146 = vmatpush1.bf16.msra.mxu0 %v127
    %147 = vmatprep.subr.bf16.mxu0 0
    %148 = vmatpush1.bf16.msra.mxu0 %v128
    %149 = vmatprep.subr.bf16.mxu0 0
    %150 = vmatpush1.bf16.msra.mxu0 %v129
    %151 = vmatprep.subr.bf16.mxu0 0
    %152 = vmatpush1.bf16.msra.mxu0 %v130
    %153 = vmatprep.subr.bf16.mxu0 0
    %154 = vmatpush1.bf16.msra.mxu0 %v131
    %155 = vmatprep.subr.bf16.mxu0 0
    %156 = vmatpush1.bf16.msra.mxu0 %v132
    %157 = vmatprep.subr.bf16.mxu0 0
    %158 = vmatpush1.bf16.msra.mxu0 0
    %159 = vmatprep.subr.bf16.mxu0 0
    %160 = vmatpush1.bf16.msra.mxu0 0
    %161 = vmatprep.subr.bf16.mxu0 0
    %162 = vmatpush1.bf16.msra.mxu0 0
    %163 = vmatprep.subr.bf16.mxu0 0
    %164 = vmatpush1.bf16.msra.mxu0 0
    %165 = vmatprep.subr.bf16.mxu0 0
    %166 = vmatpush1.bf16.msra.mxu0 0
    %167 = vmatprep.subr.bf16.mxu0 0
    %168 = vmatpush1.bf16.msra.mxu0 0
    %169 = vmatprep.subr.bf16.mxu0 0
    %170 = vmatpush1.bf16.msra.mxu0 0
    %171 = vmatprep.subr.bf16.mxu0 0
    %172 = vmatpush1.bf16.msra.mxu0 0
    %173 = vmatprep.mubr.bf16.mxu0 0
    %174 = vmatmul.mubr.bf16.gmra.mrb[0].mxu0 %v69
    %v175 = vpop.f32.mrb[0].mxu0
    %v176 = vadd.f32 %v91, %v175
    %v177 = vpop.f32.mrb[0].mxu0
    %v178 = vpop.f32.mrb[0].mxu0
    %v179 = vpop.f32.mrb[0].mxu0
    %180 = vdwg.mxu0
    %v181 = vmax.f32 %v176, 0.0
    %v182 = vpack.c.bf16 %v181, %v181
    %v183 = vld [vmem:[#allocation5] sm:$0xf]
    %v184 = vld [vmem:[#allocation5 + $0x4] sm:$0xf]
    %v185 = vld [vmem:[#allocation5 + $0x8] sm:$0xf]
    %v186 = vld [vmem:[#allocation5 + $0xc] sm:$0xf]
    %v187 = vld [vmem:[#allocation5 + $0x10] sm:$0xf]
    %v188 = vld [vmem:[#allocation5 + $0x14] sm:$0xf]
    %v189 = vld [vmem:[#allocation5 + $0x18] sm:$0xf]
    %v190 = vld [vmem:[#allocation5 + $0x1c] sm:$0xf]
    %v191 = vld [vmem:[#allocation5 + $0x20] sm:$0xf]
    %v192 = vld [vmem:[#allocation5 + $0x24] sm:$0xf]
    %v193 = vld [vmem:[#allocation5 + $0x28] sm:$0xf]
    %v194 = vld [vmem:[#allocation5 + $0x2c] sm:$0xf]
    %v195 = vld [vmem:[#allocation5 + $0x30] sm:$0xf]
    %v196 = vld [vmem:[#allocation5 + $0x34] sm:$0xf]
    %v197 = vld [vmem:[#allocation5 + $0x38] sm:$0xf]
    %v198 = vld [vmem:[#allocation5 + $0x3c] sm:$0xf]
    %v199 = vld [vmem:[%s4] sm:$0x1]
    %v201 = vlaneseq
    %v202 = vshrl.u32 %v201, 7
    %v203 = vsub.s32 0, %v202
    %v204 = vrot.slane %v199, %v203
    %v222 = vunpack.c.l.b16 %v183
    %v223 = vunpack.c.l.b16 %v184
    %v224 = vunpack.c.l.b16 %v185
    %v225 = vunpack.c.l.b16 %v186
    %v226 = vunpack.c.l.b16 %v187
    %v227 = vunpack.c.l.b16 %v188
    %v228 = vunpack.c.l.b16 %v189
    %v229 = vunpack.c.l.b16 %v190
    %v230 = vunpack.c.l.b16 %v191
    %v231 = vunpack.c.l.b16 %v192
    %v232 = vunpack.c.l.b16 %v193
    %v233 = vunpack.c.l.b16 %v194
    %v234 = vunpack.c.l.b16 %v195
    %v235 = vunpack.c.l.b16 %v196
    %v236 = vunpack.c.l.b16 %v197
    %v237 = vunpack.c.l.b16 %v198
    %v238 = vpack.c.b16 %v223, %v222
    %v239 = vpack.c.b16 %v225, %v224
    %v240 = vpack.c.b16 %v227, %v226
    %v241 = vpack.c.b16 %v229, %v228
    %v242 = vpack.c.b16 %v231, %v230
    %v243 = vpack.c.b16 %v233, %v232
    %v244 = vpack.c.b16 %v235, %v234
    %v245 = vpack.c.b16 %v237, %v236
    %254 = vmatprep.subr.bf16.mxu0 0
    %255 = vmatpush1.bf16.msra.mxu0 %v238
    %256 = vmatprep.subr.bf16.mxu0 0
    %257 = vmatpush1.bf16.msra.mxu0 %v239
    %258 = vmatprep.subr.bf16.mxu0 0
    %259 = vmatpush1.bf16.msra.mxu0 %v240
    %260 = vmatprep.subr.bf16.mxu0 0
    %261 = vmatpush1.bf16.msra.mxu0 %v241
    %262 = vmatprep.subr.bf16.mxu0 0
    %263 = vmatpush1.bf16.msra.mxu0 %v242
    %264 = vmatprep.subr.bf16.mxu0 0
    %265 = vmatpush1.bf16.msra.mxu0 %v243
    %266 = vmatprep.subr.bf16.mxu0 0
    %267 = vmatpush1.bf16.msra.mxu0 %v244
    %268 = vmatprep.subr.bf16.mxu0 0
    %269 = vmatpush1.bf16.msra.mxu0 %v245
    %270 = vmatprep.subr.bf16.mxu0 0
    %271 = vmatpush1.bf16.msra.mxu0 0
    %272 = vmatprep.subr.bf16.mxu0 0
    %273 = vmatpush1.bf16.msra.mxu0 0
    %274 = vmatprep.subr.bf16.mxu0 0
    %275 = vmatpush1.bf16.msra.mxu0 0
    %276 = vmatprep.subr.bf16.mxu0 0
    %277 = vmatpush1.bf16.msra.mxu0 0
    %278 = vmatprep.subr.bf16.mxu0 0
    %279 = vmatpush1.bf16.msra.mxu0 0
    %280 = vmatprep.subr.bf16.mxu0 0
    %281 = vmatpush1.bf16.msra.mxu0 0
    %282 = vmatprep.subr.bf16.mxu0 0
    %283 = vmatpush1.bf16.msra.mxu0 0
    %284 = vmatprep.subr.bf16.mxu0 0
    %285 = vmatpush1.bf16.msra.mxu0 0
    %286 = vmatprep.mubr.bf16.mxu0 0
    %287 = vmatmul.mubr.bf16.gmra.mrb[0].mxu0 %v182
    %v288 = vpop.f32.mrb[0].mxu0
    %v289 = vadd.f32 %v204, %v288
    %v290 = vpop.f32.mrb[0].mxu0
    %v291 = vpop.f32.mrb[0].mxu0
    %v292 = vpop.f32.mrb[0].mxu0
    %293 = vdwg.mxu0
    %v294 = vmax.f32 %v289, 0.0
    %v295 = vpack.c.bf16 %v294, %v294
    %v296 = vld [vmem:[#allocation7] sm:$0xf]
    %v297 = vld [vmem:[#allocation7 + $0x4] sm:$0xf]
    %v298 = vld [vmem:[#allocation7 + $0x8] sm:$0xf]
    %v299 = vld [vmem:[#allocation7 + $0xc] sm:$0xf]
    %v300 = vld [vmem:[#allocation7 + $0x10] sm:$0xf]
    %v301 = vld [vmem:[#allocation7 + $0x14] sm:$0xf]
    %v302 = vld [vmem:[#allocation7 + $0x18] sm:$0xf]
    %v303 = vld [vmem:[#allocation7 + $0x1c] sm:$0xf]
    %v304 = vld [vmem:[#allocation7 + $0x20] sm:$0xf]
    %v305 = vld [vmem:[#allocation7 + $0x24] sm:$0xf]
    %v306 = vld [vmem:[#allocation7 + $0x28] sm:$0xf]
    %v307 = vld [vmem:[#allocation7 + $0x2c] sm:$0xf]
    %v308 = vld [vmem:[#allocation7 + $0x30] sm:$0xf]
    %v309 = vld [vmem:[#allocation7 + $0x34] sm:$0xf]
    %v310 = vld [vmem:[#allocation7 + $0x38] sm:$0xf]
    %v311 = vld [vmem:[#allocation7 + $0x3c] sm:$0xf]
    %v312 = vld [vmem:[%s6] sm:$0x1]
    %v314 = vlaneseq
    %v315 = vshrl.u32 %v314, 7
    %v316 = vsub.s32 0, %v315
    %v317 = vrot.slane %v312, %v316
    %v335 = vunpack.c.l.b16 %v296
    %v336 = vunpack.c.l.b16 %v297
    %v337 = vunpack.c.l.b16 %v298
    %v338 = vunpack.c.l.b16 %v299
    %v339 = vunpack.c.l.b16 %v300
    %v340 = vunpack.c.l.b16 %v301
    %v341 = vunpack.c.l.b16 %v302
    %v342 = vunpack.c.l.b16 %v303
    %v343 = vunpack.c.l.b16 %v304
    %v344 = vunpack.c.l.b16 %v305
    %v345 = vunpack.c.l.b16 %v306
    %v346 = vunpack.c.l.b16 %v307
    %v347 = vunpack.c.l.b16 %v308
    %v348 = vunpack.c.l.b16 %v309
    %v349 = vunpack.c.l.b16 %v310
    %v350 = vunpack.c.l.b16 %v311
    %v351 = vpack.c.b16 %v336, %v335
    %v352 = vpack.c.b16 %v338, %v337
    %v353 = vpack.c.b16 %v340, %v339
    %v354 = vpack.c.b16 %v342, %v341
    %v355 = vpack.c.b16 %v344, %v343
    %v356 = vpack.c.b16 %v346, %v345
    %v357 = vpack.c.b16 %v348, %v347
    %v358 = vpack.c.b16 %v350, %v349
    %367 = vmatprep.subr.bf16.mxu0 0
    %368 = vmatpush1.bf16.msra.mxu0 %v351
    %369 = vmatprep.subr.bf16.mxu0 0
    %370 = vmatpush1.bf16.msra.mxu0 %v352
    %371 = vmatprep.subr.bf16.mxu0 0
    %372 = vmatpush1.bf16.msra.mxu0 %v353
    %373 = vmatprep.subr.bf16.mxu0 0
    %374 = vmatpush1.bf16.msra.mxu0 %v354
    %375 = vmatprep.subr.bf16.mxu0 0
    %376 = vmatpush1.bf16.msra.mxu0 %v355
    %377 = vmatprep.subr.bf16.mxu0 0
    %378 = vmatpush1.bf16.msra.mxu0 %v356
    %379 = vmatprep.subr.bf16.mxu0 0
    %380 = vmatpush1.bf16.msra.mxu0 %v357
    %381 = vmatprep.subr.bf16.mxu0 0
    %382 = vmatpush1.bf16.msra.mxu0 %v358
    %383 = vmatprep.subr.bf16.mxu0 0
    %384 = vmatpush1.bf16.msra.mxu0 0
    %385 = vmatprep.subr.bf16.mxu0 0
    %386 = vmatpush1.bf16.msra.mxu0 0
    %387 = vmatprep.subr.bf16.mxu0 0
    %388 = vmatpush1.bf16.msra.mxu0 0
    %389 = vmatprep.subr.bf16.mxu0 0
    %390 = vmatpush1.bf16.msra.mxu0 0
    %391 = vmatprep.subr.bf16.mxu0 0
    %392 = vmatpush1.bf16.msra.mxu0 0
    %393 = vmatprep.subr.bf16.mxu0 0
    %394 = vmatpush1.bf16.msra.mxu0 0
    %395 = vmatprep.subr.bf16.mxu0 0
    %396 = vmatpush1.bf16.msra.mxu0 0
    %397 = vmatprep.subr.bf16.mxu0 0
    %398 = vmatpush1.bf16.msra.mxu0 0
    %399 = vmatprep.mubr.bf16.mxu0 0
    %400 = vmatmul.mubr.bf16.gmra.mrb[0].mxu0 %v295
    %v401 = vpop.f32.mrb[0].mxu0
    %v402 = vadd.f32 %v317, %v401
    %v403 = vpop.f32.mrb[0].mxu0
    %v404 = vpop.f32.mrb[0].mxu0
    %v405 = vpop.f32.mrb[0].mxu0
    %406 = vdwg.mxu0
    %407 = vst [vmem:[#allocation8] sm:$0xff] %v402
    // Predicated region
    $region42: #{_joint_mlp.1} parent=1 // pred_check
      _
    $region43: #{_joint_mlp.1} parent=1 // pred_check_branch
      %409 = sbr.rel (0) target = $region45
    $region44: #{_joint_mlp.1} parent=1 // pred_region
      %s411 = ssub.s32 128, 128
      %412 = vsyncadd [#allocation4], %s411
      %s414 = sshll.u32 [#allocation8], 4
      %s415 = int_to_ptr.vmem [resolvable:$true] %s414
      %417 = dma.vmem_to_hbm [thread:$0]  %s415, 128, %s7, [#allocation4]
    $region45: #{_joint_mlp.1} parent=1 // pred_fallthru
      _
    // Predicated region
    $region46: #{_joint_mlp.1} parent=1 // pred_check
      _
    $region47: #{_joint_mlp.1} parent=1 // pred_check_branch
      %419 = sbr.rel (0) target = $region49
    $region48: #{_joint_mlp.1} parent=1 // pred_region
      %420 = dma.done [#allocation4], 128
    $region49: #{_joint_mlp.1} parent=1 // pred_fallthru
      _
    %421 = vsyncpa [#allocation3], 1
    %422 = vsyncpa [#allocation6], 1
    %423 = vsyncpa [#allocation4], 1

</llo_original>
